<compile_context>
chip_gen: v7x
topology: tpu7x:2x2x1
jax: 0.10.0
libtpu: 0.0.40
codegen_flags: <defaults>
</compile_context>

<pallas_src>
import math

import jax
import jax.numpy as jnp
from jax.experimental import pallas as pl
from jax.experimental.pallas import tpu as pltpu

INPUT_SIZE = 20
HIDDEN_SIZES = [128, 64, 32]
OUT_SIZE = 2
BN_EPS = 1e-5

# ~4.5 KB VMEM per batch row (x/out blocks lane-padded to 128 and double-buffered,
# plus f32 intermediates h1/h2/h3 and their bf16 MXU copies).  4096 rows ~= 18-19 MiB.
MAX_TILE_B = 4096
# Explicit scoped-VMEM limit: above the 16 MiB v5e default (needed for tile_b=4096),
# comfortably below v7x's 64 MiB physical VMEM per TensorCore.
VMEM_LIMIT_BYTES = 48 << 20


# --------------------------------------------------------------------------- #
# Kernel
# --------------------------------------------------------------------------- #
def _mlp_kernel(x_ref,
                w1_ref, b1_ref,
                w2_ref, b2_ref,
                w3_ref, b3_ref,
                w4t_ref, b4_ref,
                o_ref):
    # BatchNorm (eval, running stats) is pre-folded into w2/b2, w3/b3, w4t/b4.
    # Dropout is identity in eval mode.
    wdt = w1_ref.dtype  # weight dtype (bf16); accumulation & elementwise are f32.

    x = x_ref[...].astype(wdt)
    h = jnp.dot(x, w1_ref[...], preferred_element_type=jnp.float32) + b1_ref[...]
    h = jnp.maximum(h, 0.0)

    h = jnp.dot(h.astype(wdt), w2_ref[...], preferred_element_type=jnp.float32) + b2_ref[...]
    h = jnp.maximum(h, 0.0)

    h = jnp.dot(h.astype(wdt), w3_ref[...], preferred_element_type=jnp.float32) + b3_ref[...]
    h = jnp.maximum(h, 0.0)

    # Final (32 -> 2) layer on VPU multiply + XLU lane-reduce instead of the MXU.
    # w4t_ref is (2, 32) f32 (pre-transposed, BN-folded).
    w4t = w4t_ref[...]
    o0 = jnp.sum(h * w4t[0:1, :], axis=-1, keepdims=True)
    o1 = jnp.sum(h * w4t[1:2, :], axis=-1, keepdims=True)
    out = jnp.concatenate([o0, o1], axis=-1) + b4_ref[...]
    o_ref[...] = out.astype(o_ref.dtype)


# --------------------------------------------------------------------------- #
# One-time parameter preparation (BN fold + dtype cast + reshape/transpose),
# hoisted out of the per-call path.
# --------------------------------------------------------------------------- #
def prepare_inference_params(params, weight_dtype=jnp.bfloat16):
    def bn_affine(p):
        scale = p["gamma"] / jnp.sqrt(p["running_var"] + BN_EPS)
        shift = p["beta"] - p["running_mean"] * scale
        return scale, shift

    s1, t1 = bn_affine(params["bn1"])
    s2, t2 = bn_affine(params["bn2"])
    s3, t3 = bn_affine(params["bn3"])

    # Fold BN_i (applied after ReLU of layer i) into Linear_{i+1}.
    w1 = params["w1_t"]
    b1 = params["b1"]
    w2 = s1[:, None] * params["w2_t"]
    b2 = params["b2"] + t1 @ params["w2_t"]
    w3 = s2[:, None] * params["w3_t"]
    b3 = params["b3"] + t2 @ params["w3_t"]
    w4 = s3[:, None] * params["w4_t"]
    b4 = params["b4"] + t3 @ params["w4_t"]

    prep = {
        "w1": w1.astype(weight_dtype), "b1": b1.reshape(1, -1).astype(jnp.float32),
        "w2": w2.astype(weight_dtype), "b2": b2.reshape(1, -1).astype(jnp.float32),
        "w3": w3.astype(weight_dtype), "b3": b3.reshape(1, -1).astype(jnp.float32),
        # Final layer runs on the VPU/XLU: keep f32 (no bf16 VPU on v5e) and
        # pre-transpose to (2, 32) so each output column is a lane-reduce.
        "w4t": jnp.transpose(w4).astype(jnp.float32),
        "b4": b4.reshape(1, -1).astype(jnp.float32),
    }
    return jax.tree_util.tree_map(jnp.asarray, prep)


def _choose_tile_b(batch):
    # Guarantee >= 2 grid steps whenever the batch allows it, so both v7x
    # TensorCores get work under dimension_semantics=("parallel",).  For huge
    # batches fall back to the fixed MAX_TILE_B (already many steps).
    if batch > 2 * MAX_TILE_B:
        return MAX_TILE_B
    half = -(-batch // 2)                  # cdiv(batch, 2)
    return max(8, ((half + 7) // 8) * 8)   # round up to a sublane multiple (8)


def _cost_estimate(batch, prep):
    flops = 2 * batch * (INPUT_SIZE * 128 + 128 * 64 + 64 * 32 + 32 * OUT_SIZE)
    weight_bytes = sum(int(v.size) * v.dtype.itemsize for v in prep.values())
    bytes_accessed = batch * (INPUT_SIZE + OUT_SIZE) * 4 + weight_bytes
    return pl.CostEstimate(flops=flops, transcendentals=0,
                           bytes_accessed=bytes_accessed)


# --------------------------------------------------------------------------- #
# Forward wrapper
# --------------------------------------------------------------------------- #
@jax.jit
def skewness_kurtosis_forward(x, prep):
    """x: [B, 20] float32, prep: prepare_inference_params(...) -> [B, 2] float32."""
    batch = x.shape[0]
    tile_b = _choose_tile_b(batch)
    grid = (pl.cdiv(batch, tile_b),)

    def resident(arr):
        # Full-extent block, same block index every grid step -> stays VMEM-resident.
        return pl.BlockSpec(arr.shape, lambda i: (0, 0))

    args = (x,
            prep["w1"], prep["b1"],
            prep["w2"], prep["b2"],
            prep["w3"], prep["b3"],
            prep["w4t"], prep["b4"])

    in_specs = [pl.BlockSpec((tile_b, INPUT_SIZE), lambda i: (i, 0))]
    in_specs += [resident(a) for a in args[1:]]

    return pl.pallas_call(
        _mlp_kernel,
        out_shape=jax.ShapeDtypeStruct((batch, OUT_SIZE), jnp.float32),
        grid=grid,
        in_specs=in_specs,
        out_specs=pl.BlockSpec((tile_b, OUT_SIZE), lambda i: (i, 0)),
        compiler_params=pltpu.CompilerParams(
            dimension_semantics=("parallel",),
            vmem_limit_bytes=VMEM_LIMIT_BYTES),
        cost_estimate=_cost_estimate(batch, prep),
    )(*args)


# --------------------------------------------------------------------------- #
# Reference (pure JAX, f32) and deterministic init matching the PyTorch module
# --------------------------------------------------------------------------- #
def reference_forward(x, params):
    h = x
    for i in range(1, 4):
        h = h @ params[f"w{i}_t"] + params[f"b{i}"]
        h = jnp.maximum(h, 0.0)
        bn = params[f"bn{i}"]
        scale = bn["gamma"] / jnp.sqrt(bn["running_var"] + BN_EPS)
        h = (h - bn["running_mean"]) * scale + bn["beta"]
    return h @ params["w4_t"] + params["b4"]


def init_params(key):
    """xavier_uniform weights, bias=0.01, BN gamma=1/beta=0, running mean=0/var=1."""
    sizes = [INPUT_SIZE] + HIDDEN_SIZES + [OUT_SIZE]
    params = {}
    keys = jax.random.split(key, len(sizes) - 1)
    for i, (fan_in, fan_out) in enumerate(zip(sizes[:-1], sizes[1:]), start=1):
        bound = math.sqrt(6.0 / (fan_in + fan_out))
        w = jax.random.uniform(keys[i - 1], (fan_out, fan_in),
                               minval=-bound, maxval=bound, dtype=jnp.float32)
        params[f"w{i}_t"] = jnp.transpose(w)  # [in, out]
        params[f"b{i}"] = jnp.full((fan_out,), 0.01, dtype=jnp.float32)
        if i <= len(HIDDEN_SIZES):
            params[f"bn{i}"] = {
                "gamma": jnp.ones((fan_out,), jnp.float32),
                "beta": jnp.zeros((fan_out,), jnp.float32),
                "running_mean": jnp.zeros((fan_out,), jnp.float32),
                "running_var": jnp.ones((fan_out,), jnp.float32),
            }
    return params


if __name__ == "__main__":
    key = jax.random.PRNGKey(0)
    pkey, k1, k2, k3 = jax.random.split(key, 4)
    params = init_params(pkey)
    prep = prepare_inference_params(params)  # one-time BN fold / cast / transpose

    # Single-tile case (batch too small to split further: min tile is 8 rows).
    batch = 8
    x = jax.random.normal(k1, (batch, INPUT_SIZE), dtype=jnp.float32)
    out = jax.block_until_ready(skewness_kurtosis_forward(x, prep))
    ref = reference_forward(x, params)
    assert out.shape == (batch, OUT_SIZE), out.shape
    assert out.dtype == jnp.float32, out.dtype
    assert bool(jnp.all(jnp.isfinite(out)))
    assert bool(jnp.allclose(out, ref, rtol=5e-2, atol=5e-2)), (out, ref)

    # Two-tile case with a partial (masked) final tile: tile_b=8, grid=(2,).
    batch2 = 10
    x2 = jax.random.normal(k2, (batch2, INPUT_SIZE), dtype=jnp.float32)
    out2 = jax.block_until_ready(skewness_kurtosis_forward(x2, prep))
    ref2 = reference_forward(x2, params)
    assert out2.shape == (batch2, OUT_SIZE), out2.shape
    assert bool(jnp.all(jnp.isfinite(out2)))
    assert bool(jnp.allclose(out2, ref2, rtol=5e-2, atol=5e-2)), (out2, ref2)

    # Two exact tiles (even split -> both v7x cores get a full tile): tile_b=32, grid=(2,).
    batch3 = 64
    x3 = jax.random.normal(k3, (batch3, INPUT_SIZE), dtype=jnp.float32)
    out3 = jax.block_until_ready(skewness_kurtosis_forward(x3, prep))
    ref3 = reference_forward(x3, params)
    assert out3.shape == (batch3, OUT_SIZE), out3.shape
    assert bool(jnp.all(jnp.isfinite(out3)))
    assert bool(jnp.allclose(out3, ref3, rtol=5e-2, atol=5e-2)), (out3, ref3)

    print("KERNEL_OK")
</pallas_src>

<mosaic_0001>
module attributes {stable_mosaic.version = 11 : i64} {
  func.func @_mlp_kernel(%arg0: i32, %arg1: memref<8x20xf32, #tpu.memory_space<vmem>>, %arg2: memref<20x128xbf16, #tpu.memory_space<vmem>>, %arg3: memref<1x128xf32, #tpu.memory_space<vmem>>, %arg4: memref<128x64xbf16, #tpu.memory_space<vmem>>, %arg5: memref<1x64xf32, #tpu.memory_space<vmem>>, %arg6: memref<64x32xbf16, #tpu.memory_space<vmem>>, %arg7: memref<1x32xf32, #tpu.memory_space<vmem>>, %arg8: memref<2x32xf32, #tpu.memory_space<vmem>>, %arg9: memref<1x2xf32, #tpu.memory_space<vmem>>, %arg10: memref<8x2xf32, #tpu.memory_space<vmem>>) attributes {dimension_semantics = [#tpu.dimension_semantics<parallel>], iteration_bounds = array<i64: 1>, scalar_prefetch = 0 : i64, scratch_operands = 0 : i64, tpu.core_type = #tpu.core_type<tc>, window_params = [{transform_indices = @transform_0, window_bounds = array<i64: 8, 20>}, {pipeline_mode = #tpu.pipeline_mode<synchronous>, transform_indices = @transform_1, window_bounds = array<i64: 20, 128>}, {pipeline_mode = #tpu.pipeline_mode<synchronous>, transform_indices = @transform_2, window_bounds = array<i64: 1, 128>}, {pipeline_mode = #tpu.pipeline_mode<synchronous>, transform_indices = @transform_3, window_bounds = array<i64: 128, 64>}, {pipeline_mode = #tpu.pipeline_mode<synchronous>, transform_indices = @transform_4, window_bounds = array<i64: 1, 64>}, {pipeline_mode = #tpu.pipeline_mode<synchronous>, transform_indices = @transform_5, window_bounds = array<i64: 64, 32>}, {pipeline_mode = #tpu.pipeline_mode<synchronous>, transform_indices = @transform_6, window_bounds = array<i64: 1, 32>}, {pipeline_mode = #tpu.pipeline_mode<synchronous>, transform_indices = @transform_7, window_bounds = array<i64: 2, 32>}, {pipeline_mode = #tpu.pipeline_mode<synchronous>, transform_indices = @transform_8, window_bounds = array<i64: 1, 2>}, {transform_indices = @transform_9, window_bounds = array<i64: 8, 2>}]} {
    %c0 = arith.constant 0 : index
    %c0_0 = arith.constant 0 : index
    %0 = vector.load %arg1[%c0, %c0_0] : memref<8x20xf32, #tpu.memory_space<vmem>>, vector<8x20xf32>
    %1 = arith.truncf %0 : vector<8x20xf32> to vector<8x20xbf16>
    %c0_1 = arith.constant 0 : index
    %c0_2 = arith.constant 0 : index
    %2 = vector.load %arg2[%c0_1, %c0_2] : memref<20x128xbf16, #tpu.memory_space<vmem>>, vector<20x128xbf16>
    %cst = arith.constant dense<0.000000e+00> : vector<8x128xf32>
    %3 = tpu.matmul %1, %2, %cst {dimension_numbers = #tpu.dot_dimension_numbers<[1], [0], [0], [1], [0, 0, 1, 1], [], []>} : vector<8x20xbf16>, vector<20x128xbf16>, vector<8x128xf32> -> vector<8x128xf32>
    %c0_3 = arith.constant 0 : index
    %c0_4 = arith.constant 0 : index
    %4 = vector.load %arg3[%c0_3, %c0_4] : memref<1x128xf32, #tpu.memory_space<vmem>>, vector<1x128xf32>
    %5 = vector.broadcast %4 : vector<1x128xf32> to vector<8x128xf32>
    %6 = arith.addf %3, %5 : vector<8x128xf32>
    %cst_5 = arith.constant 0.000000e+00 : f32
    %7 = vector.broadcast %cst_5 : f32 to vector<8x128xf32>
    %8 = arith.maximumf %6, %7 : vector<8x128xf32>
    %9 = arith.truncf %8 : vector<8x128xf32> to vector<8x128xbf16>
    %c0_6 = arith.constant 0 : index
    %c0_7 = arith.constant 0 : index
    %10 = vector.load %arg4[%c0_6, %c0_7] : memref<128x64xbf16, #tpu.memory_space<vmem>>, vector<128x64xbf16>
    %cst_8 = arith.constant dense<0.000000e+00> : vector<8x64xf32>
    %11 = tpu.matmul %9, %10, %cst_8 {dimension_numbers = #tpu.dot_dimension_numbers<[1], [0], [0], [1], [0, 0, 1, 1], [], []>} : vector<8x128xbf16>, vector<128x64xbf16>, vector<8x64xf32> -> vector<8x64xf32>
    %c0_9 = arith.constant 0 : index
    %c0_10 = arith.constant 0 : index
    %12 = vector.load %arg5[%c0_9, %c0_10] : memref<1x64xf32, #tpu.memory_space<vmem>>, vector<1x64xf32>
    %13 = vector.broadcast %12 : vector<1x64xf32> to vector<8x64xf32>
    %14 = arith.addf %11, %13 : vector<8x64xf32>
    %cst_11 = arith.constant 0.000000e+00 : f32
    %15 = vector.broadcast %cst_11 : f32 to vector<8x64xf32>
    %16 = arith.maximumf %14, %15 : vector<8x64xf32>
    %17 = arith.truncf %16 : vector<8x64xf32> to vector<8x64xbf16>
    %c0_12 = arith.constant 0 : index
    %c0_13 = arith.constant 0 : index
    %18 = vector.load %arg6[%c0_12, %c0_13] : memref<64x32xbf16, #tpu.memory_space<vmem>>, vector<64x32xbf16>
    %cst_14 = arith.constant dense<0.000000e+00> : vector<8x32xf32>
    %19 = tpu.matmul %17, %18, %cst_14 {dimension_numbers = #tpu.dot_dimension_numbers<[1], [0], [0], [1], [0, 0, 1, 1], [], []>} : vector<8x64xbf16>, vector<64x32xbf16>, vector<8x32xf32> -> vector<8x32xf32>
    %c0_15 = arith.constant 0 : index
    %c0_16 = arith.constant 0 : index
    %20 = vector.load %arg7[%c0_15, %c0_16] : memref<1x32xf32, #tpu.memory_space<vmem>>, vector<1x32xf32>
    %21 = vector.broadcast %20 : vector<1x32xf32> to vector<8x32xf32>
    %22 = arith.addf %19, %21 : vector<8x32xf32>
    %cst_17 = arith.constant 0.000000e+00 : f32
    %23 = vector.broadcast %cst_17 : f32 to vector<8x32xf32>
    %24 = arith.maximumf %22, %23 : vector<8x32xf32>
    %c0_18 = arith.constant 0 : index
    %c0_19 = arith.constant 0 : index
    %25 = vector.load %arg8[%c0_18, %c0_19] : memref<2x32xf32, #tpu.memory_space<vmem>>, vector<2x32xf32>
    %26 = vector.extract_strided_slice %25 {offsets = [0, 0], sizes = [1, 32], strides = [1, 1]} : vector<2x32xf32> to vector<1x32xf32>
    %27 = vector.broadcast %26 : vector<1x32xf32> to vector<8x32xf32>
    %28 = arith.mulf %24, %27 : vector<8x32xf32>
    %cst_20 = arith.constant dense<0.000000e+00> : vector<8xf32>
    %29 = vector.multi_reduction <add>, %28, %cst_20 [1] : vector<8x32xf32> to vector<8xf32>
    %30 = vector.shape_cast %29 : vector<8xf32> to vector<8x1xf32>
    %31 = vector.extract_strided_slice %25 {offsets = [1, 0], sizes = [1, 32], strides = [1, 1]} : vector<2x32xf32> to vector<1x32xf32>
    %32 = vector.broadcast %31 : vector<1x32xf32> to vector<8x32xf32>
    %33 = arith.mulf %24, %32 : vector<8x32xf32>
    %cst_21 = arith.constant dense<0.000000e+00> : vector<8xf32>
    %34 = vector.multi_reduction <add>, %33, %cst_21 [1] : vector<8x32xf32> to vector<8xf32>
    %35 = vector.shape_cast %34 : vector<8xf32> to vector<8x1xf32>
    %36 = tpu.concatenate %30, %35 in 1 : vector<8x1xf32>, vector<8x1xf32> -> vector<8x2xf32>
    %c0_22 = arith.constant 0 : index
    %c0_23 = arith.constant 0 : index
    %37 = vector.load %arg9[%c0_22, %c0_23] : memref<1x2xf32, #tpu.memory_space<vmem>>, vector<1x2xf32>
    %38 = vector.broadcast %37 : vector<1x2xf32> to vector<8x2xf32>
    %39 = arith.addf %36, %38 : vector<8x2xf32>
    %c0_24 = arith.constant 0 : index
    %c0_25 = arith.constant 0 : index
    %40 = vector.load %arg10[%c0_24, %c0_25] : memref<8x2xf32, #tpu.memory_space<vmem>>, vector<8x2xf32>
    tpu.vector_store %arg10[%c0_24, %c0_25], %39 {strides = array<i32>} : memref<8x2xf32, #tpu.memory_space<vmem>>, vector<8x2xf32>,
    return
  }
  func.func @transform_0(%arg0: i32) -> (i32, i32) {
    %c0_i32 = arith.constant 0 : i32
    %c0_i32_0 = arith.constant 0 : i32
    return %arg0, %c0_i32 : i32, i32
  }
  func.func @transform_1(%arg0: i32) -> (i32, i32) {
    %c0_i32 = arith.constant 0 : i32
    %c0_i32_0 = arith.constant 0 : i32
    %c0_i32_1 = arith.constant 0 : i32
    return %c0_i32, %c0_i32_0 : i32, i32
  }
  func.func @transform_2(%arg0: i32) -> (i32, i32) {
    %c0_i32 = arith.constant 0 : i32
    %c0_i32_0 = arith.constant 0 : i32
    %c0_i32_1 = arith.constant 0 : i32
    return %c0_i32, %c0_i32_0 : i32, i32
  }
  func.func @transform_3(%arg0: i32) -> (i32, i32) {
    %c0_i32 = arith.constant 0 : i32
    %c0_i32_0 = arith.constant 0 : i32
    %c0_i32_1 = arith.constant 0 : i32
    return %c0_i32, %c0_i32_0 : i32, i32
  }
  func.func @transform_4(%arg0: i32) -> (i32, i32) {
    %c0_i32 = arith.constant 0 : i32
    %c0_i32_0 = arith.constant 0 : i32
    %c0_i32_1 = arith.constant 0 : i32
    return %c0_i32, %c0_i32_0 : i32, i32
  }
  func.func @transform_5(%arg0: i32) -> (i32, i32) {
    %c0_i32 = arith.constant 0 : i32
    %c0_i32_0 = arith.constant 0 : i32
    %c0_i32_1 = arith.constant 0 : i32
    return %c0_i32, %c0_i32_0 : i32, i32
  }
  func.func @transform_6(%arg0: i32) -> (i32, i32) {
    %c0_i32 = arith.constant 0 : i32
    %c0_i32_0 = arith.constant 0 : i32
    %c0_i32_1 = arith.constant 0 : i32
    return %c0_i32, %c0_i32_0 : i32, i32
  }
  func.func @transform_7(%arg0: i32) -> (i32, i32) {
    %c0_i32 = arith.constant 0 : i32
    %c0_i32_0 = arith.constant 0 : i32
    %c0_i32_1 = arith.constant 0 : i32
    return %c0_i32, %c0_i32_0 : i32, i32
  }
  func.func @transform_8(%arg0: i32) -> (i32, i32) {
    %c0_i32 = arith.constant 0 : i32
    %c0_i32_0 = arith.constant 0 : i32
    %c0_i32_1 = arith.constant 0 : i32
    return %c0_i32, %c0_i32_0 : i32, i32
  }
  func.func @transform_9(%arg0: i32) -> (i32, i32) {
    %c0_i32 = arith.constant 0 : i32
    %c0_i32_0 = arith.constant 0 : i32
    return %arg0, %c0_i32 : i32, i32
  }
}

</mosaic_0001>

<llo_original>
// kernel: skewness_kurtosis_forward.1
$region0: #{skewness_kurtosis_forward.1}
  #allocation0 [shape = 'u32[]', space=smem, size = 0x4, offset = 0x4, fixed_abs, tag = 'smem constant byte address 0x4 - core index']
  #allocation1 [shape = 'u32[144,128]{1,0:T(1,128)}', space=vmem, size = 0x12000, scoped, tag = 'internal scratch']
  %s0 = inlined_call_operand.vmem [shape: f32[8,20], index: 0, kind: input, shape index: {}]
  %s1 = inlined_call_operand.vmem [shape: bf16[20,128], index: 1, kind: input, shape index: {}]
  %s2 = inlined_call_operand.vmem [shape: f32[1,128], index: 2, kind: input, shape index: {}]
  %s3 = inlined_call_operand.vmem [shape: bf16[128,64], index: 3, kind: input, shape index: {}]
  %s4 = inlined_call_operand.vmem [shape: f32[1,64], index: 4, kind: input, shape index: {}]
  %s5 = inlined_call_operand.vmem [shape: bf16[64,32], index: 5, kind: input, shape index: {}]
  %s6 = inlined_call_operand.vmem [shape: f32[1,32], index: 6, kind: input, shape index: {}]
  %s7 = inlined_call_operand.vmem [shape: f32[2,32], index: 7, kind: input, shape index: {}]
  %s8 = inlined_call_operand.vmem [shape: f32[1,2], index: 8, kind: input, shape index: {}]
  %s9 = inlined_call_operand.vmem [shape: f32[8,2], index: 9, kind: output, shape index: {}]
  %s10 = sld [smem:[#allocation0]]
  $region46: #{skewness_kurtosis_forward.1} parent=0
    _
  %s12 = ssub.s32 1, %s10
  %s13 = scalar_select 0, %s12, %s10
  // Predicated region
  $region2: #{skewness_kurtosis_forward.1} parent=0 // pred_check
    _
  $region3: #{skewness_kurtosis_forward.1} parent=0 // pred_check_branch
    %15 = sbr.rel (0) target = $region5
  $region4: #{skewness_kurtosis_forward.1} parent=0 // pred_region
    _
  $region5: #{skewness_kurtosis_forward.1} parent=0 // pred_fallthru
    _
  // Predicated region
  $region6: #{skewness_kurtosis_forward.1} parent=0 // pred_check
    _
  $region7: #{skewness_kurtosis_forward.1} parent=0 // pred_check_branch
    %17 = sbr.rel (0) target = $region9
  $region8: #{skewness_kurtosis_forward.1} parent=0 // pred_region
    _
  $region9: #{skewness_kurtosis_forward.1} parent=0 // pred_fallthru
    _
  // Predicated region
  $region10: #{skewness_kurtosis_forward.1} parent=0 // pred_check
    _
  $region11: #{skewness_kurtosis_forward.1} parent=0 // pred_check_branch
    %19 = sbr.rel (0) target = $region13
  $region12: #{skewness_kurtosis_forward.1} parent=0 // pred_region
    _
  $region13: #{skewness_kurtosis_forward.1} parent=0 // pred_fallthru
    _
  // Predicated region
  $region14: #{skewness_kurtosis_forward.1} parent=0 // pred_check
    _
  $region15: #{skewness_kurtosis_forward.1} parent=0 // pred_check_branch
    %21 = sbr.rel (0) target = $region17
  $region16: #{skewness_kurtosis_forward.1} parent=0 // pred_region
    _
  $region17: #{skewness_kurtosis_forward.1} parent=0 // pred_fallthru
    _
  // Predicated region
  $region18: #{skewness_kurtosis_forward.1} parent=0 // pred_check
    _
  $region19: #{skewness_kurtosis_forward.1} parent=0 // pred_check_branch
    %23 = sbr.rel (0) target = $region21
  $region20: #{skewness_kurtosis_forward.1} parent=0 // pred_region
    _
  $region21: #{skewness_kurtosis_forward.1} parent=0 // pred_fallthru
    _
  // Predicated region
  $region22: #{skewness_kurtosis_forward.1} parent=0 // pred_check
    _
  $region23: #{skewness_kurtosis_forward.1} parent=0 // pred_check_branch
    %25 = sbr.rel (0) target = $region25
  $region24: #{skewness_kurtosis_forward.1} parent=0 // pred_region
    _
  $region25: #{skewness_kurtosis_forward.1} parent=0 // pred_fallthru
    _
  // Predicated region
  $region26: #{skewness_kurtosis_forward.1} parent=0 // pred_check
    _
  $region27: #{skewness_kurtosis_forward.1} parent=0 // pred_check_branch
    %27 = sbr.rel (0) target = $region29
  $region28: #{skewness_kurtosis_forward.1} parent=0 // pred_region
    _
  $region29: #{skewness_kurtosis_forward.1} parent=0 // pred_fallthru
    _
  // Predicated region
  $region30: #{skewness_kurtosis_forward.1} parent=0 // pred_check
    _
  $region31: #{skewness_kurtosis_forward.1} parent=0 // pred_check_branch
    %29 = sbr.rel (0) target = $region33
  $region32: #{skewness_kurtosis_forward.1} parent=0 // pred_region
    _
  $region33: #{skewness_kurtosis_forward.1} parent=0 // pred_fallthru
    _
  // Predicated region
  $region34: #{skewness_kurtosis_forward.1} parent=0 // pred_check
    _
  $region35: #{skewness_kurtosis_forward.1} parent=0 // pred_check_branch
    %31 = sbr.rel (0) target = $region37
  $region36: #{skewness_kurtosis_forward.1} parent=0 // pred_region
    _
  $region37: #{skewness_kurtosis_forward.1} parent=0 // pred_fallthru
    _
  %v33 = vld [vmem:[%s0] sm:$0xff]
  %v34 = vpack.c.bf16 %v33, %v33
  %v35 = vld [vmem:[%s1] sm:$0xf]
  %v36 = vld [vmem:[%s1 + $0x4] sm:$0xf]
  %v37 = vld [vmem:[%s1 + $0x8] sm:$0x3]
  %v38 = vld [vmem:[%s2] sm:$0x1]
  %v40 = vlaneseq
  %v41 = vshrl.u32 %v40, 7
  %v42 = vsub.s32 0, %v41
  %v43 = vrot.slane %v38, %v42
  %v48 = vunpack.c.l.b16 %v35
  %v49 = vunpack.c.l.b16 %v36
  %v50 = vunpack.c.l.b16 %v37
  %v51 = vpack.c.b16 %v49, %v48
  %v52 = vpack.c.b16 %v50, %v50
  %vm54 = vcmask 162816
  %v56 = vsel %vm54, %v34, 0
  %vm58 = vcmask 1041408
  %v60 = vsel %vm58, %v52, 0
  %62 = vmatprep.subr.bf16.mxu0 0
  %63 = vmatpush1.bf16.msra.mxu0 %v51
  %64 = vmatprep.subr.bf16.mxu0 0
  %65 = vmatpush1.bf16.msra.mxu0 %v60
  %66 = vmatprep.subr.bf16.mxu0 0
  %67 = vmatpush1.bf16.msra.mxu0 0
  %68 = vmatprep.subr.bf16.mxu0 0
  %69 = vmatpush1.bf16.msra.mxu0 0
  %70 = vmatprep.subr.bf16.mxu0 0
  %71 = vmatpush1.bf16.msra.mxu0 0
  %72 = vmatprep.subr.bf16.mxu0 0
  %73 = vmatpush1.bf16.msra.mxu0 0
  %74 = vmatprep.subr.bf16.mxu0 0
  %75 = vmatpush1.bf16.msra.mxu0 0
  %76 = vmatprep.subr.bf16.mxu0 0
  %77 = vmatpush1.bf16.msra.mxu0 0
  %78 = vmatprep.subr.bf16.mxu0 0
  %79 = vmatpush1.bf16.msra.mxu0 0
  %80 = vmatprep.subr.bf16.mxu0 0
  %81 = vmatpush1.bf16.msra.mxu0 0
  %82 = vmatprep.subr.bf16.mxu0 0
  %83 = vmatpush1.bf16.msra.mxu0 0
  %84 = vmatprep.subr.bf16.mxu0 0
  %85 = vmatpush1.bf16.msra.mxu0 0
  %86 = vmatprep.subr.bf16.mxu0 0
  %87 = vmatpush1.bf16.msra.mxu0 0
  %88 = vmatprep.subr.bf16.mxu0 0
  %89 = vmatpush1.bf16.msra.mxu0 0
  %90 = vmatprep.subr.bf16.mxu0 0
  %91 = vmatpush1.bf16.msra.mxu0 0
  %92 = vmatprep.subr.bf16.mxu0 0
  %93 = vmatpush1.bf16.msra.mxu0 0
  %94 = vmatprep.mubr.bf16.mxu0 0
  %95 = vmatmul.mubr.bf16.gmra.mrb[0].mxu0 %v56
  %v96 = vpop.f32.mrb[0].mxu0
  %v97 = vadd.f32 %v43, %v96
  %v98 = vpop.f32.mrb[0].mxu0
  %v99 = vpop.f32.mrb[0].mxu0
  %v100 = vpop.f32.mrb[0].mxu0
  %101 = vdwg.mxu0
  %v102 = vmax.f32 %v97, 0.0
  %v103 = vpack.c.bf16 %v102, %v102
  %v104 = vld [vmem:[%s3] sm:$0xf]
  %v105 = vld [vmem:[%s3 + $0x4] sm:$0xf]
  %v106 = vld [vmem:[%s3 + $0x8] sm:$0xf]
  %v107 = vld [vmem:[%s3 + $0xc] sm:$0xf]
  %v108 = vld [vmem:[%s3 + $0x10] sm:$0xf]
  %v109 = vld [vmem:[%s3 + $0x14] sm:$0xf]
  %v110 = vld [vmem:[%s3 + $0x18] sm:$0xf]
  %v111 = vld [vmem:[%s3 + $0x1c] sm:$0xf]
  %v112 = vld [vmem:[%s3 + $0x20] sm:$0xf]
  %v113 = vld [vmem:[%s3 + $0x24] sm:$0xf]
  %v114 = vld [vmem:[%s3 + $0x28] sm:$0xf]
  %v115 = vld [vmem:[%s3 + $0x2c] sm:$0xf]
  %v116 = vld [vmem:[%s3 + $0x30] sm:$0xf]
  %v117 = vld [vmem:[%s3 + $0x34] sm:$0xf]
  %v118 = vld [vmem:[%s3 + $0x38] sm:$0xf]
  %v119 = vld [vmem:[%s3 + $0x3c] sm:$0xf]
  %v120 = vld [vmem:[%s4] sm:$0x1]
  %v122 = vlaneseq
  %v123 = vshrl.u32 %v122, 7
  %v124 = vsub.s32 0, %v123
  %v125 = vrot.slane %v120, %v124
  %v143 = vunpack.c.l.b16 %v104
  %v144 = vunpack.c.l.b16 %v105
  %v145 = vunpack.c.l.b16 %v106
  %v146 = vunpack.c.l.b16 %v107
  %v147 = vunpack.c.l.b16 %v108
  %v148 = vunpack.c.l.b16 %v109
  %v149 = vunpack.c.l.b16 %v110
  %v150 = vunpack.c.l.b16 %v111
  %v151 = vunpack.c.l.b16 %v112
  %v152 = vunpack.c.l.b16 %v113
  %v153 = vunpack.c.l.b16 %v114
  %v154 = vunpack.c.l.b16 %v115
  %v155 = vunpack.c.l.b16 %v116
  %v156 = vunpack.c.l.b16 %v117
  %v157 = vunpack.c.l.b16 %v118
  %v158 = vunpack.c.l.b16 %v119
  %v159 = vpack.c.b16 %v144, %v143
  %v160 = vpack.c.b16 %v146, %v145
  %v161 = vpack.c.b16 %v148, %v147
  %v162 = vpack.c.b16 %v150, %v149
  %v163 = vpack.c.b16 %v152, %v151
  %v164 = vpack.c.b16 %v154, %v153
  %v165 = vpack.c.b16 %v156, %v155
  %v166 = vpack.c.b16 %v158, %v157
  %175 = vmatprep.subr.bf16.mxu0 0
  %176 = vmatpush1.bf16.msra.mxu0 %v159
  %177 = vmatprep.subr.bf16.mxu0 0
  %178 = vmatpush1.bf16.msra.mxu0 %v160
  %179 = vmatprep.subr.bf16.mxu0 0
  %180 = vmatpush1.bf16.msra.mxu0 %v161
  %181 = vmatprep.subr.bf16.mxu0 0
  %182 = vmatpush1.bf16.msra.mxu0 %v162
  %183 = vmatprep.subr.bf16.mxu0 0
  %184 = vmatpush1.bf16.msra.mxu0 %v163
  %185 = vmatprep.subr.bf16.mxu0 0
  %186 = vmatpush1.bf16.msra.mxu0 %v164
  %187 = vmatprep.subr.bf16.mxu0 0
  %188 = vmatpush1.bf16.msra.mxu0 %v165
  %189 = vmatprep.subr.bf16.mxu0 0
  %190 = vmatpush1.bf16.msra.mxu0 %v166
  %191 = vmatprep.subr.bf16.mxu0 0
  %192 = vmatpush1.bf16.msra.mxu0 0
  %193 = vmatprep.subr.bf16.mxu0 0
  %194 = vmatpush1.bf16.msra.mxu0 0
  %195 = vmatprep.subr.bf16.mxu0 0
  %196 = vmatpush1.bf16.msra.mxu0 0
  %197 = vmatprep.subr.bf16.mxu0 0
  %198 = vmatpush1.bf16.msra.mxu0 0
  %199 = vmatprep.subr.bf16.mxu0 0
  %200 = vmatpush1.bf16.msra.mxu0 0
  %201 = vmatprep.subr.bf16.mxu0 0
  %202 = vmatpush1.bf16.msra.mxu0 0
  %203 = vmatprep.subr.bf16.mxu0 0
  %204 = vmatpush1.bf16.msra.mxu0 0
  %205 = vmatprep.subr.bf16.mxu0 0
  %206 = vmatpush1.bf16.msra.mxu0 0
  %207 = vmatprep.mubr.bf16.mxu0 0
  %208 = vmatmul.mubr.bf16.gmra.mrb[0].mxu0 %v103
  %v209 = vpop.f32.mrb[0].mxu0
  %v210 = vadd.f32 %v125, %v209
  %v211 = vpop.f32.mrb[0].mxu0
  %v212 = vpop.f32.mrb[0].mxu0
  %v213 = vpop.f32.mrb[0].mxu0
  %214 = vdwg.mxu0
  %v215 = vmax.f32 %v210, 0.0
  %v216 = vpack.c.bf16 %v215, %v215
  %v217 = vld [vmem:[%s5] sm:$0xf]
  %v218 = vld [vmem:[%s5 + $0x4] sm:$0xf]
  %v219 = vld [vmem:[%s5 + $0x8] sm:$0xf]
  %v220 = vld [vmem:[%s5 + $0xc] sm:$0xf]
  %v221 = vld [vmem:[%s5 + $0x10] sm:$0xf]
  %v222 = vld [vmem:[%s5 + $0x14] sm:$0xf]
  %v223 = vld [vmem:[%s5 + $0x18] sm:$0xf]
  %v224 = vld [vmem:[%s5 + $0x1c] sm:$0xf]
  %v225 = vld [vmem:[%s6] sm:$0x1]
  %v227 = vlaneseq
  %v228 = vshrl.u32 %v227, 7
  %v229 = vsub.s32 0, %v228
  %v230 = vrot.slane %v225, %v229
  %v240 = vunpack.c.l.b16 %v217
  %v241 = vunpack.c.l.b16 %v218
  %v242 = vunpack.c.l.b16 %v219
  %v243 = vunpack.c.l.b16 %v220
  %v244 = vunpack.c.l.b16 %v221
  %v245 = vunpack.c.l.b16 %v222
  %v246 = vunpack.c.l.b16 %v223
  %v247 = vunpack.c.l.b16 %v224
  %v248 = vpack.c.b16 %v241, %v240
  %v249 = vpack.c.b16 %v243, %v242
  %v250 = vpack.c.b16 %v245, %v244
  %v251 = vpack.c.b16 %v247, %v246
  %vm256 = vcmask 523264
  %v258 = vsel %vm256, %v216, 0
  %260 = vmatprep.subr.bf16.mxu0 0
  %261 = vmatpush1.bf16.msra.mxu0 %v248
  %262 = vmatprep.subr.bf16.mxu0 0
  %263 = vmatpush1.bf16.msra.mxu0 %v249
  %264 = vmatprep.subr.bf16.mxu0 0
  %265 = vmatpush1.bf16.msra.mxu0 %v250
  %266 = vmatprep.subr.bf16.mxu0 0
  %267 = vmatpush1.bf16.msra.mxu0 %v251
  %268 = vmatprep.subr.bf16.mxu0 0
  %269 = vmatpush1.bf16.msra.mxu0 0
  %270 = vmatprep.subr.bf16.mxu0 0
  %271 = vmatpush1.bf16.msra.mxu0 0
  %272 = vmatprep.subr.bf16.mxu0 0
  %273 = vmatpush1.bf16.msra.mxu0 0
  %274 = vmatprep.subr.bf16.mxu0 0
  %275 = vmatpush1.bf16.msra.mxu0 0
  %276 = vmatprep.subr.bf16.mxu0 0
  %277 = vmatpush1.bf16.msra.mxu0 0
  %278 = vmatprep.subr.bf16.mxu0 0
  %279 = vmatpush1.bf16.msra.mxu0 0
  %280 = vmatprep.subr.bf16.mxu0 0
  %281 = vmatpush1.bf16.msra.mxu0 0
  %282 = vmatprep.subr.bf16.mxu0 0
  %283 = vmatpush1.bf16.msra.mxu0 0
  %284 = vmatprep.subr.bf16.mxu0 0
  %285 = vmatpush1.bf16.msra.mxu0 0
  %286 = vmatprep.subr.bf16.mxu0 0
  %287 = vmatpush1.bf16.msra.mxu0 0
  %288 = vmatprep.subr.bf16.mxu0 0
  %289 = vmatpush1.bf16.msra.mxu0 0
  %290 = vmatprep.subr.bf16.mxu0 0
  %291 = vmatpush1.bf16.msra.mxu0 0
  %292 = vmatprep.mubr.bf16.mxu0 0
  %293 = vmatmul.mubr.bf16.gmra.mrb[0].mxu0 %v258
  %v294 = vpop.f32.mrb[0].mxu0
  %v295 = vadd.f32 %v230, %v294
  %v296 = vpop.f32.mrb[0].mxu0
  %v297 = vpop.f32.mrb[0].mxu0
  %v298 = vpop.f32.mrb[0].mxu0
  %299 = vdwg.mxu0
  %v300 = vmax.f32 %v295, 0.0
  %v301 = vld [vmem:[%s7] sm:$0x3]
  %v302 = vlaneseq
  %v303 = vshrl.u32 %v302, 7
  %v304 = vsub.s32 0, %v303
  %v305 = vrot.slane %v301, %v304
  %v306 = vmul.f32 %v300, %v305
  %vm307 = vcmask 261120
  %v308 = vsel %vm307, %v306, 0.0
  %309 = vadd.xlane.f32.xlu0 %v308
  %v310 = vpop.xlane.xlu0 %309
  %v311 = vlaneseq
  %v312 = vshrl.u32 %v311, 7
  %v313 = vsub.s32 1, %v312
  %v314 = vrot.slane %v301, %v313
  %v315 = vmul.f32 %v300, %v314
  %v316 = vsel %vm307, %v315, 0.0
  %317 = vadd.xlane.f32.xlu0 %v316
  %v318 = vpop.xlane.xlu0 %317
  %vm319 = vcmask 7168
  %v320 = vsel %vm319, %v310, %v318
  %v321 = vld [vmem:[%s8] sm:$0x1]
  %v323 = vlaneseq
  %v324 = vshrl.u32 %v323, 7
  %v325 = vsub.s32 0, %v324
  %v326 = vrot.slane %v321, %v325
  %v328 = vadd.f32 %v320, %v326
  %vm329 = vcmask 15360
  %330 = vst.msk [vmem:[%s9] sm:$0xff] %vm329, %v328
  // Predicated region
  $region38: #{skewness_kurtosis_forward.1} parent=0 // pred_check
    _
  $region39: #{skewness_kurtosis_forward.1} parent=0 // pred_check_branch
    %332 = sbr.rel (0) target = $region41
  $region40: #{skewness_kurtosis_forward.1} parent=0 // pred_region
    _
  $region41: #{skewness_kurtosis_forward.1} parent=0 // pred_fallthru
    _
  // Predicated region
  $region42: #{skewness_kurtosis_forward.1} parent=0 // pred_check
    _
  $region43: #{skewness_kurtosis_forward.1} parent=0 // pred_check_branch
    %334 = sbr.rel (0) target = $region45
  $region44: #{skewness_kurtosis_forward.1} parent=0 // pred_region
    _
  $region45: #{skewness_kurtosis_forward.1} parent=0 // pred_fallthru
    _

</llo_original>
